<compile_context>
chip_gen: v6e
topology: v6e:2x2x1
jax: 0.10.0
libtpu: 0.0.40
codegen_flags: <defaults>
</compile_context>

<pallas_src>
import functools

import jax
import jax.numpy as jnp
from jax.experimental import pallas as pl
from jax.experimental.pallas import tpu as pltpu


def _feature_extractor_kernel(x_ref, halo_ref, mask_ref, w1_ref, b1_ref,
                              wh_ref, bh_ref, desc_ref, score_ref, *, W, Cd):
    """One grid step == one (image, pixel-tile) pair.  Channel-major layout:
    channels on sublanes, pixels on lanes.

    x_ref    : (Cin, TPIX)      bf16  flat padded image, this tile
    halo_ref : (Cin, HALO)      bf16  next HALO pixels (right halo for taps)
    mask_ref : (2,   TPIX)      bf16  row 0: 0 where w==0, row 1: 0 where w==W-1
    w1_ref   : (Chid, 9*Cin)    bf16  3x3 conv as an im2col weight (transposed)
    b1_ref   : (Chid, 1)        f32
    wh_ref   : (Cf,  Chid)      bf16  fused (descriptor | score) head, Cf = 8-mult
    bh_ref   : (Cf,  1)         f32
    desc_ref : (Cd,  TPIX)            L2-normalized descriptors (channel-major)
    score_ref: (1,   TPIX)            sigmoid scores (lane-dense)
    """
    tpx = x_ref.shape[1]

    # Pixel tile plus its right halo: flat index p of the tile maps to padded
    # image flat position  tile_start + p  with a built-in left offset of W+1,
    # so tap (dy, dx) of the 3x3 window is the slice starting at dy*W + dx.
    x_cat = jnp.concatenate([x_ref[...], halo_ref[...]], axis=1)  # (Cin, TPIX+HALO)

    mask_l = mask_ref[0:1, :]   # kills row-wrapped reads of column w-1 at w==0
    mask_r = mask_ref[1:2, :]   # kills row-wrapped reads of column w+1 at w==W-1

    taps = []
    for dy in range(3):
        for dx in range(3):
            off = dy * W + dx
            tap = x_cat[:, off:off + tpx]                 # (Cin, TPIX) bf16
            if dx == 0:
                tap = tap * mask_l
            elif dx == 2:
                tap = tap * mask_r
            taps.append(tap)
    patches = jnp.concatenate(taps, axis=0)               # (9*Cin, TPIX) bf16

    # 3x3 conv as ONE MXU matmul (K = 9*Cin); f32 accumulation, f32 ReLU.
    feat = jnp.dot(w1_ref[...], patches,
                   preferred_element_type=jnp.float32)
    feat = jnp.maximum(feat + b1_ref[...], 0.0)            # (Chid, TPIX) f32

    # Fused descriptor + score heads: one matmul, channel-major output.
    head = jnp.dot(wh_ref[...], feat.astype(wh_ref.dtype),
                   preferred_element_type=jnp.float32) + bh_ref[...]  # (Cf, TPIX)

    desc = head[:Cd, :]                                    # (Cd, TPIX) f32
    inv_norm = jax.lax.rsqrt(
        jnp.sum(desc * desc, axis=0, keepdims=True) + 1e-8)
    desc_ref[...] = (desc * inv_norm).astype(desc_ref.dtype)
    score_ref[...] = jax.nn.sigmoid(head[Cd:Cd + 1, :]).astype(score_ref.dtype)


@functools.partial(jax.jit, static_argnames=("tile_px", "out_dtype"))
def feature_extractor_forward(image_nchw, w1, b1, wd, bd, ws, bs, *,
                              tile_px=4096, out_dtype=jnp.bfloat16):
    """image_nchw: [N, Cin, H, W] f32 -> (descriptor_map [N, Cd, H, W],
                                          scores_map     [N, 1,  H, W])."""
    N, Cin, H, W = image_nchw.shape
    Chid = w1.shape[2]
    Cd = wd.shape[1]
    HW = H * W

    # Right-halo width: taps need up to 2*W + 2 pixels past the tile end.
    HALO = ((2 * W + 2 + 127) // 128) * 128

    # Tile selection: largest multiple of HALO that is <= tile_px and divides
    # H*W.  Per-step VMEM ~ tpx*(9*Cin*2 + Chid*4 + Cf*4 + Cd*6 + few) bytes,
    # ~10 MiB at tpx=8192 / Cd=64 -> comfortably inside 48 MiB on all gens.
    tpx = min(tile_px, HW)
    tpx = (tpx // HALO) * HALO
    while tpx > HALO and HW % tpx != 0:
        tpx -= HALO
    # TODO(synk): handle ragged tiles (H*W with no multiple-of-HALO divisor).
    assert tpx >= HALO and HW % tpx == 0 and tpx % HALO == 0, (
        "H*W must be divisible by a lane-aligned tile >= 2*W+2")
    n_tiles = HW // tpx

    # ---- Input prep: NCHW -> flat channel-major (N, Cin, L) bf16 with
    # L = n_tiles*tpx + HALO; left pad of W+1 zeros absorbs the top/left
    # out-of-image taps, right pad (>= W+1 zeros) absorbs bottom/right ones.
    PADL = W + 1
    L = n_tiles * tpx + HALO
    PADR = L - PADL - HW                                    # >= W + 1
    x_flat = image_nchw.reshape(N, Cin, HW).astype(jnp.bfloat16)
    x_flat = jnp.pad(x_flat, ((0, 0), (0, 0), (PADL, PADR)))

    # 0/1 edge masks on the dense pixel axis (row-wrap correction for the
    # left/right taps).  Tiny, shared across the batch.
    col = jnp.arange(HW, dtype=jnp.int32) % W
    edge_mask = jnp.stack([col != 0, col != (W - 1)], axis=0).astype(jnp.bfloat16)

    # ---- Weight prep (channel-major): im2col conv weight + fused head.
    w1_flat = jnp.transpose(w1, (2, 0, 1)).reshape(Chid, 9 * Cin).astype(jnp.bfloat16)
    b1_col = b1.reshape(Chid, 1).astype(jnp.float32)
    Cf = ((Cd + 1 + 7) // 8) * 8                            # sublane multiple only
    w_heads = jnp.concatenate([wd, ws], axis=1).T           # (Cd+1, Chid)
    w_heads = jnp.pad(w_heads, ((0, Cf - (Cd + 1)), (0, 0))).astype(jnp.bfloat16)
    b_heads = jnp.concatenate([bd, bs], axis=1).reshape(Cd + 1, 1)
    b_heads = jnp.pad(b_heads, ((0, Cf - (Cd + 1)), (0, 0))).astype(jnp.float32)

    kernel = functools.partial(_feature_extractor_kernel, W=W, Cd=Cd)
    halo_blocks_per_tile = tpx // HALO

    grid = (N, n_tiles)
    in_specs = [
        pl.BlockSpec((None, Cin, tpx), lambda n, t: (n, 0, t)),
        pl.BlockSpec((None, Cin, HALO),
                     lambda n, t: (n, 0, (t + 1) * halo_blocks_per_tile)),
        pl.BlockSpec((2, tpx), lambda n, t: (0, t)),
        pl.BlockSpec((Chid, 9 * Cin), lambda n, t: (0, 0)),
        pl.BlockSpec((Chid, 1), lambda n, t: (0, 0)),
        pl.BlockSpec((Cf, Chid), lambda n, t: (0, 0)),
        pl.BlockSpec((Cf, 1), lambda n, t: (0, 0)),
    ]
    out_specs = [
        pl.BlockSpec((None, Cd, tpx), lambda n, t: (n, 0, t)),
        pl.BlockSpec((None, 1, tpx), lambda n, t: (n, 0, t)),
    ]
    out_shapes = [
        jax.ShapeDtypeStruct((N, Cd, HW), out_dtype),        # NCHW (HW flat)
        jax.ShapeDtypeStruct((N, 1, HW), out_dtype),
    ]

    desc_flat, score_flat = pl.pallas_call(
        kernel,
        grid=grid,
        in_specs=in_specs,
        out_specs=out_specs,
        out_shape=out_shapes,
        compiler_params=pltpu.CompilerParams(
            dimension_semantics=("parallel", "parallel"),
            vmem_limit_bytes=48 * 1024 * 1024),
    )(x_flat, x_flat, edge_mask, w1_flat, b1_col, w_heads, b_heads)

    # Free metadata reshapes to the PyTorch/ONNX layout.
    descriptor_map = desc_flat.reshape(N, Cd, H, W)
    scores_map = score_flat.reshape(N, 1, H, W)
    return descriptor_map, scores_map


def _reference_forward(image_nchw, w1, b1, wd, bd, ws, bs):
    """Pure-JAX reference with the same bf16 rounding of matmul inputs as the
    kernel (accumulation and elementwise math stay f32)."""
    f32 = jnp.float32
    hp = jax.lax.Precision.HIGHEST
    rnd = lambda a: a.astype(jnp.bfloat16).astype(f32)

    x = jnp.transpose(image_nchw, (0, 2, 3, 1))
    x = rnd(jnp.pad(x, ((0, 0), (1, 1), (1, 1), (0, 0))))
    N, Hp, Wp, Cin = x.shape
    H, W = Hp - 2, Wp - 2
    Chid = w1.shape[2]
    w1r = rnd(w1)

    acc = jnp.zeros((N, H, W, Chid), f32)
    for t in range(9):
        dy, dx = t // 3, t % 3
        acc = acc + jnp.einsum("nhwc,cf->nhwf",
                               x[:, dy:dy + H, dx:dx + W, :], w1r[t],
                               precision=hp)
    feat = jnp.maximum(acc + b1.reshape(1, 1, 1, Chid), 0.0)
    feat = rnd(feat)

    desc = jnp.einsum("nhwf,fd->nhwd", feat, rnd(wd),
                      precision=hp) + bd.reshape(1, 1, 1, -1)
    desc = desc * jax.lax.rsqrt(
        jnp.sum(desc * desc, axis=-1, keepdims=True) + 1e-8)
    logits = jnp.einsum("nhwf,fs->nhws", feat, rnd(ws),
                        precision=hp) + bs.reshape(1, 1, 1, -1)
    score = jax.nn.sigmoid(logits)
    return (jnp.transpose(desc, (0, 3, 1, 2)),
            jnp.transpose(score, (0, 3, 1, 2)))


def _init_params(key, cin, chid, cd):
    k1, k2, k3 = jax.random.split(key, 3)
    w1 = 0.1 * jax.random.normal(k1, (9, cin, chid), jnp.float32)
    b1 = jnp.zeros((1, chid), jnp.float32)
    wd = 0.1 * jax.random.normal(k2, (chid, cd), jnp.float32)
    bd = jnp.zeros((1, cd), jnp.float32)
    ws = 0.1 * jax.random.normal(k3, (chid, 1), jnp.float32)
    bs = jnp.zeros((1, 1), jnp.float32)
    return w1, b1, wd, bd, ws, bs


if __name__ == "__main__":
    key = jax.random.PRNGKey(0)
    k_img, k_par = jax.random.split(key)

    N, Cin, H, W = 2, 4, 16, 16
    Chid, Cd = 32, 64

    image = jax.random.normal(k_img, (N, Cin, H, W), jnp.float32)
    params = _init_params(k_par, Cin, Chid, Cd)

    ref_desc, ref_score = _reference_forward(image, *params)

    # tile_px=128: grid (2, 2) -> exercises cross-tile halo + edge masks.
    # tile_px=4096 (default band): clamps to one tile per image, grid (2, 1).
    for tpx in (128, 4096):
        descriptor_map, scores_map = feature_extractor_forward(
            image, *params, tile_px=tpx)
        jax.block_until_ready((descriptor_map, scores_map))

        assert descriptor_map.shape == (N, Cd, H, W)
        assert scores_map.shape == (N, 1, H, W)

        d32 = descriptor_map.astype(jnp.float32)
        s32 = scores_map.astype(jnp.float32)

        # Descriptors are unit-norm along the channel axis (normalization in
        # f32, bf16 only on the final store).
        norms = jnp.linalg.norm(d32, axis=1)
        assert bool(jnp.all(jnp.abs(norms - 1.0) < 1e-2))
        # Scores are sigmoid outputs.
        assert bool(jnp.all((s32 >= 0.0) & (s32 <= 1.0)))

        # Match the pure-JAX reference (tolerance covers bf16 output rounding).
        assert bool(jnp.max(jnp.abs(d32 - ref_desc)) < 8e-3)
        assert bool(jnp.max(jnp.abs(s32 - ref_score)) < 8e-3)

    print("KERNEL_OK")
</pallas_src>

<mosaic_0001>
module attributes {stable_mosaic.version = 11 : i64} {
  func.func @_feature_extractor_kernel(%arg0: i32, %arg1: i32, %arg2: memref<1x4x128xbf16, #tpu.memory_space<vmem>>, %arg3: memref<1x4x128xbf16, #tpu.memory_space<vmem>>, %arg4: memref<2x128xbf16, #tpu.memory_space<vmem>>, %arg5: memref<32x36xbf16, #tpu.memory_space<vmem>>, %arg6: memref<32x1xf32, #tpu.memory_space<vmem>>, %arg7: memref<72x32xbf16, #tpu.memory_space<vmem>>, %arg8: memref<72x1xf32, #tpu.memory_space<vmem>>, %arg9: memref<1x64x128xbf16, #tpu.memory_space<vmem>>, %arg10: memref<1x1x128xbf16, #tpu.memory_space<vmem>>) attributes {dimension_semantics = [#tpu.dimension_semantics<parallel>, #tpu.dimension_semantics<parallel>], iteration_bounds = array<i64: 2, 2>, scalar_prefetch = 0 : i64, scratch_operands = 0 : i64, tpu.core_type = #tpu.core_type<tc>, window_params = [{transform_indices = @transform_0, window_bounds = array<i64: 1, 4, 128>}, {transform_indices = @transform_1, window_bounds = array<i64: 1, 4, 128>}, {transform_indices = @transform_2, window_bounds = array<i64: 2, 128>}, {pipeline_mode = #tpu.pipeline_mode<synchronous>, transform_indices = @transform_3, window_bounds = array<i64: 32, 36>}, {pipeline_mode = #tpu.pipeline_mode<synchronous>, transform_indices = @transform_4, window_bounds = array<i64: 32, 1>}, {pipeline_mode = #tpu.pipeline_mode<synchronous>, transform_indices = @transform_5, window_bounds = array<i64: 72, 32>}, {pipeline_mode = #tpu.pipeline_mode<synchronous>, transform_indices = @transform_6, window_bounds = array<i64: 72, 1>}, {transform_indices = @transform_7, window_bounds = array<i64: 1, 64, 128>}, {transform_indices = @transform_8, window_bounds = array<i64: 1, 1, 128>}]} {
    %c0 = arith.constant 0 : index
    %c0_0 = arith.constant 0 : index
    %c0_1 = arith.constant 0 : index
    %0 = vector.load %arg2[%c0, %c0_0, %c0_1] : memref<1x4x128xbf16, #tpu.memory_space<vmem>>, vector<1x4x128xbf16>
    %1 = vector.shape_cast %0 : vector<1x4x128xbf16> to vector<4x128xbf16>
    %c0_2 = arith.constant 0 : index
    %c0_3 = arith.constant 0 : index
    %c0_4 = arith.constant 0 : index
    %2 = vector.load %arg3[%c0_2, %c0_3, %c0_4] : memref<1x4x128xbf16, #tpu.memory_space<vmem>>, vector<1x4x128xbf16>
    %3 = vector.shape_cast %2 : vector<1x4x128xbf16> to vector<4x128xbf16>
    %4 = tpu.concatenate %1, %3 in 1 : vector<4x128xbf16>, vector<4x128xbf16> -> vector<4x256xbf16>
    %c0_5 = arith.constant 0 : index
    %c0_6 = arith.constant 0 : index
    %5 = vector.load %arg4[%c0_5, %c0_6] : memref<2x128xbf16, #tpu.memory_space<vmem>>, vector<1x128xbf16>
    %c1 = arith.constant 1 : index
    %c0_7 = arith.constant 0 : index
    %6 = vector.load %arg4[%c1, %c0_7] : memref<2x128xbf16, #tpu.memory_space<vmem>>, vector<1x128xbf16>
    %7 = vector.extract_strided_slice %4 {offsets = [0, 0], sizes = [4, 128], strides = [1, 1]} : vector<4x256xbf16> to vector<4x128xbf16>
    %8 = vector.broadcast %5 : vector<1x128xbf16> to vector<4x128xbf16>
    %9 = arith.mulf %7, %8 : vector<4x128xbf16>
    %10 = vector.extract_strided_slice %4 {offsets = [0, 1], sizes = [4, 128], strides = [1, 1]} : vector<4x256xbf16> to vector<4x128xbf16>
    %11 = vector.extract_strided_slice %4 {offsets = [0, 2], sizes = [4, 128], strides = [1, 1]} : vector<4x256xbf16> to vector<4x128xbf16>
    %12 = vector.broadcast %6 : vector<1x128xbf16> to vector<4x128xbf16>
    %13 = arith.mulf %11, %12 : vector<4x128xbf16>
    %14 = vector.extract_strided_slice %4 {offsets = [0, 16], sizes = [4, 128], strides = [1, 1]} : vector<4x256xbf16> to vector<4x128xbf16>
    %15 = vector.broadcast %5 : vector<1x128xbf16> to vector<4x128xbf16>
    %16 = arith.mulf %14, %15 : vector<4x128xbf16>
    %17 = vector.extract_strided_slice %4 {offsets = [0, 17], sizes = [4, 128], strides = [1, 1]} : vector<4x256xbf16> to vector<4x128xbf16>
    %18 = vector.extract_strided_slice %4 {offsets = [0, 18], sizes = [4, 128], strides = [1, 1]} : vector<4x256xbf16> to vector<4x128xbf16>
    %19 = vector.broadcast %6 : vector<1x128xbf16> to vector<4x128xbf16>
    %20 = arith.mulf %18, %19 : vector<4x128xbf16>
    %21 = vector.extract_strided_slice %4 {offsets = [0, 32], sizes = [4, 128], strides = [1, 1]} : vector<4x256xbf16> to vector<4x128xbf16>
    %22 = vector.broadcast %5 : vector<1x128xbf16> to vector<4x128xbf16>
    %23 = arith.mulf %21, %22 : vector<4x128xbf16>
    %24 = vector.extract_strided_slice %4 {offsets = [0, 33], sizes = [4, 128], strides = [1, 1]} : vector<4x256xbf16> to vector<4x128xbf16>
    %25 = vector.extract_strided_slice %4 {offsets = [0, 34], sizes = [4, 128], strides = [1, 1]} : vector<4x256xbf16> to vector<4x128xbf16>
    %26 = vector.broadcast %6 : vector<1x128xbf16> to vector<4x128xbf16>
    %27 = arith.mulf %25, %26 : vector<4x128xbf16>
    %28 = tpu.concatenate %9, %10, %13, %16, %17, %20, %23, %24, %27 in 0 : vector<4x128xbf16>, vector<4x128xbf16>, vector<4x128xbf16>, vector<4x128xbf16>, vector<4x128xbf16>, vector<4x128xbf16>, vector<4x128xbf16>, vector<4x128xbf16>, vector<4x128xbf16> -> vector<36x128xbf16>
    %c0_8 = arith.constant 0 : index
    %c0_9 = arith.constant 0 : index
    %29 = vector.load %arg5[%c0_8, %c0_9] : memref<32x36xbf16, #tpu.memory_space<vmem>>, vector<32x36xbf16>
    %cst = arith.constant dense<0.000000e+00> : vector<32x128xf32>
    %30 = tpu.matmul %29, %28, %cst {dimension_numbers = #tpu.dot_dimension_numbers<[1], [0], [0], [1], [0, 0, 1, 1], [], []>} : vector<32x36xbf16>, vector<36x128xbf16>, vector<32x128xf32> -> vector<32x128xf32>
    %c0_10 = arith.constant 0 : index
    %c0_11 = arith.constant 0 : index
    %31 = vector.load %arg6[%c0_10, %c0_11] : memref<32x1xf32, #tpu.memory_space<vmem>>, vector<32x1xf32>
    %32 = vector.broadcast %31 : vector<32x1xf32> to vector<32x128xf32>
    %33 = arith.addf %30, %32 : vector<32x128xf32>
    %cst_12 = arith.constant 0.000000e+00 : f32
    %34 = vector.broadcast %cst_12 : f32 to vector<32x128xf32>
    %35 = arith.maximumf %33, %34 : vector<32x128xf32>
    %c0_13 = arith.constant 0 : index
    %c0_14 = arith.constant 0 : index
    %36 = vector.load %arg7[%c0_13, %c0_14] : memref<72x32xbf16, #tpu.memory_space<vmem>>, vector<72x32xbf16>
    %37 = arith.truncf %35 : vector<32x128xf32> to vector<32x128xbf16>
    %cst_15 = arith.constant dense<0.000000e+00> : vector<72x128xf32>
    %38 = tpu.matmul %36, %37, %cst_15 {dimension_numbers = #tpu.dot_dimension_numbers<[1], [0], [0], [1], [0, 0, 1, 1], [], []>} : vector<72x32xbf16>, vector<32x128xbf16>, vector<72x128xf32> -> vector<72x128xf32>
    %c0_16 = arith.constant 0 : index
    %c0_17 = arith.constant 0 : index
    %39 = vector.load %arg8[%c0_16, %c0_17] : memref<72x1xf32, #tpu.memory_space<vmem>>, vector<72x1xf32>
    %40 = vector.broadcast %39 : vector<72x1xf32> to vector<72x128xf32>
    %41 = arith.addf %38, %40 : vector<72x128xf32>
    %42 = vector.extract_strided_slice %41 {offsets = [0, 0], sizes = [64, 128], strides = [1, 1]} : vector<72x128xf32> to vector<64x128xf32>
    %43 = arith.mulf %42, %42 : vector<64x128xf32>
    %cst_18 = arith.constant dense<0.000000e+00> : vector<128xf32>
    %44 = vector.multi_reduction <add>, %43, %cst_18 [0] : vector<64x128xf32> to vector<128xf32>
    %45 = vector.shape_cast %44 : vector<128xf32> to vector<1x128xf32>
    %cst_19 = arith.constant 9.99999993E-9 : f32
    %46 = vector.broadcast %cst_19 : f32 to vector<1x128xf32>
    %47 = arith.addf %45, %46 : vector<1x128xf32>
    %48 = math.rsqrt %47 : vector<1x128xf32>
    %49 = vector.broadcast %48 : vector<1x128xf32> to vector<64x128xf32>
    %50 = arith.mulf %42, %49 : vector<64x128xf32>
    %51 = arith.truncf %50 : vector<64x128xf32> to vector<64x128xbf16>
    %c0_20 = arith.constant 0 : index
    %c0_21 = arith.constant 0 : index
    %c0_22 = arith.constant 0 : index
    %52 = vector.load %arg9[%c0_20, %c0_21, %c0_22] : memref<1x64x128xbf16, #tpu.memory_space<vmem>>, vector<1x64x128xbf16>
    %53 = vector.shape_cast %52 : vector<1x64x128xbf16> to vector<64x128xbf16>
    %54 = vector.shape_cast %51 : vector<64x128xbf16> to vector<1x64x128xbf16>
    tpu.vector_store %arg9[%c0_20, %c0_21, %c0_22], %54 {strides = array<i32>} : memref<1x64x128xbf16, #tpu.memory_space<vmem>>, vector<1x64x128xbf16>,
    %55 = vector.extract_strided_slice %41 {offsets = [64, 0], sizes = [1, 128], strides = [1, 1]} : vector<72x128xf32> to vector<1x128xf32>
    %56 = arith.negf %55 : vector<1x128xf32>
    %57 = math.exp %56 : vector<1x128xf32>
    %cst_23 = arith.constant 1.000000e+00 : f32
    %58 = vector.broadcast %cst_23 : f32 to vector<1x128xf32>
    %59 = arith.addf %58, %57 : vector<1x128xf32>
    %60 = arith.divf %58, %59 : vector<1x128xf32>
    %61 = arith.truncf %60 : vector<1x128xf32> to vector<1x128xbf16>
    %c0_24 = arith.constant 0 : index
    %c0_25 = arith.constant 0 : index
    %c0_26 = arith.constant 0 : index
    %62 = vector.load %arg10[%c0_24, %c0_25, %c0_26] : memref<1x1x128xbf16, #tpu.memory_space<vmem>>, vector<1x1x128xbf16>
    %63 = vector.shape_cast %62 : vector<1x1x128xbf16> to vector<1x128xbf16>
    %64 = vector.shape_cast %61 : vector<1x128xbf16> to vector<1x1x128xbf16>
    tpu.vector_store %arg10[%c0_24, %c0_25, %c0_26], %64 {strides = array<i32>} : memref<1x1x128xbf16, #tpu.memory_space<vmem>>, vector<1x1x128xbf16>,
    return
  }
  func.func @transform_0(%arg0: i32, %arg1: i32) -> (i32, i32, i32) {
    %c0_i32 = arith.constant 0 : i32
    %c0_i32_0 = arith.constant 0 : i32
    return %arg0, %c0_i32, %arg1 : i32, i32, i32
  }
  func.func @transform_1(%arg0: i32, %arg1: i32) -> (i32, i32, i32) {
    %c1_i32 = arith.constant 1 : i32
    %0 = arith.addi %arg1, %c1_i32 : i32
    %c1_i32_0 = arith.constant 1 : i32
    %1 = arith.muli %0, %c1_i32_0 : i32
    %c0_i32 = arith.constant 0 : i32
    %c0_i32_1 = arith.constant 0 : i32
    return %arg0, %c0_i32, %1 : i32, i32, i32
  }
  func.func @transform_2(%arg0: i32, %arg1: i32) -> (i32, i32) {
    %c0_i32 = arith.constant 0 : i32
    %c0_i32_0 = arith.constant 0 : i32
    return %c0_i32, %arg1 : i32, i32
  }
  func.func @transform_3(%arg0: i32, %arg1: i32) -> (i32, i32) {
    %c0_i32 = arith.constant 0 : i32
    %c0_i32_0 = arith.constant 0 : i32
    %c0_i32_1 = arith.constant 0 : i32
    return %c0_i32, %c0_i32_0 : i32, i32
  }
  func.func @transform_4(%arg0: i32, %arg1: i32) -> (i32, i32) {
    %c0_i32 = arith.constant 0 : i32
    %c0_i32_0 = arith.constant 0 : i32
    %c0_i32_1 = arith.constant 0 : i32
    return %c0_i32, %c0_i32_0 : i32, i32
  }
  func.func @transform_5(%arg0: i32, %arg1: i32) -> (i32, i32) {
    %c0_i32 = arith.constant 0 : i32
    %c0_i32_0 = arith.constant 0 : i32
    %c0_i32_1 = arith.constant 0 : i32
    return %c0_i32, %c0_i32_0 : i32, i32
  }
  func.func @transform_6(%arg0: i32, %arg1: i32) -> (i32, i32) {
    %c0_i32 = arith.constant 0 : i32
    %c0_i32_0 = arith.constant 0 : i32
    %c0_i32_1 = arith.constant 0 : i32
    return %c0_i32, %c0_i32_0 : i32, i32
  }
  func.func @transform_7(%arg0: i32, %arg1: i32) -> (i32, i32, i32) {
    %c0_i32 = arith.constant 0 : i32
    %c0_i32_0 = arith.constant 0 : i32
    return %arg0, %c0_i32, %arg1 : i32, i32, i32
  }
  func.func @transform_8(%arg0: i32, %arg1: i32) -> (i32, i32, i32) {
    %c0_i32 = arith.constant 0 : i32
    %c0_i32_0 = arith.constant 0 : i32
    return %arg0, %c0_i32, %arg1 : i32, i32, i32
  }
}

</mosaic_0001>

<llo_original>
// kernel: feature_extractor_forward.1
$region0: #{feature_extractor_forward.1}
  #allocation0 [shape = 'u32[]', space=smem, size = 0x4, offset = 0x4, fixed_abs, tag = 'smem constant byte address 0x4 - core index']
  #allocation1 [shape = 'u32[144,128]{1,0:T(1,128)}', space=vmem, size = 0x12000, scoped, tag = 'internal scratch']
  %s0 = inlined_call_operand.vmem [shape: bf16[2,4,384], index: 0, kind: input, shape index: {}, may-alias: {0,1}]
  %s1 = inlined_call_operand.vmem [shape: bf16[2,4,384], index: 1, kind: input, shape index: {}, may-alias: {0,1}]
  %s2 = inlined_call_operand.vmem [shape: bf16[2,256], index: 2, kind: input, shape index: {}]
  %s3 = inlined_call_operand.vmem [shape: bf16[32,36], index: 3, kind: input, shape index: {}]
  %s4 = inlined_call_operand.vmem [shape: f32[32,1], index: 4, kind: input, shape index: {}]
  %s5 = inlined_call_operand.vmem [shape: bf16[72,32], index: 5, kind: input, shape index: {}]
  %s6 = inlined_call_operand.vmem [shape: f32[72,1], index: 6, kind: input, shape index: {}]
  %s7 = inlined_call_operand.vmem [shape: bf16[2,64,256], index: 7, kind: output, shape index: {0}]
  %s8 = inlined_call_operand.vmem [shape: bf16[2,1,256], index: 8, kind: output, shape index: {1}]
  %9 = xla_tuple %s7, %s8
  %s10 = sld [smem:[#allocation0]]
  $region106: #{feature_extractor_forward.1} parent=0
    _
  %s12 = ssub.s32 1, %s10
  %s13 = scalar_select 0, %s12, %s10
  $region1: #{feature_extractor_forward.1} parent=0
    #allocation2 [shape = 'u8[32768]{0}', space=vmem, size = 0x8000, scoped, tag = 'output window, operand 0']
    loop: start=0, step=1, limit=6
    $region2: #{feature_extractor_forward.1} parent=1 // loop_pre_header
      _
    $region3: #{feature_extractor_forward.1} parent=1 // loop_header
      %s15 = sphi 0, %s19
      %p16 = scmp.ge.s32.totalorder %s15, 6
      %s22 = sphi 0, %s34
      %s23 = sphi 0, %s30
      %s24 = sphi 0, %s22
      %s25 = sphi 0, %s23
      %s26 = sphi 0, %s24
      %s27 = sphi 0, %s25
      %s39 = sphi 0, %s41
      %s42 = sphi 0, %s39
      %s43 = sphi 0, %s42
      %s59 = sphi 0, %s43
      %s69 = sphi 0, %s71
      %s72 = sphi 0, %s69
      %s73 = sphi 0, %s72
      %s89 = sphi 0, %s73
      %s95 = sphi 0, %s97
      %s98 = sphi 0, %s95
      %s99 = sphi 0, %s98
      %s115 = sphi 0, %s99
      %s119 = sphi 0, %s119
      %s121 = sphi 0, %s119
      %s122 = sphi 0, %s121
      %s136 = sphi 0, %s122
      %s140 = sphi 0, %s140
      %s142 = sphi 0, %s140
      %s143 = sphi 0, %s142
      %s157 = sphi 0, %s143
      %s161 = sphi 0, %s161
      %s163 = sphi 0, %s161
      %s164 = sphi 0, %s163
      %s178 = sphi 0, %s164
      %s182 = sphi 0, %s182
      %s184 = sphi 0, %s182
      %s185 = sphi 0, %s184
      %s199 = sphi 0, %s185
      %s207 = sphi 0, %s209
      %s210 = sphi 0, %s207
      %s211 = sphi 0, %s210
      %s227 = sphi 0, %s211
      %s235 = sphi 0, %s237
      %s238 = sphi 0, %s235
      %s239 = sphi 0, %s238
      %s255 = sphi 0, %s239
    $region4: #{feature_extractor_forward.1} parent=1 // loop_header_branch
      %18 = sbr.rel (%p16) target = $region8
    $region5: #{feature_extractor_forward.1} parent=1 // loop_body
      %s20 = ssub.s32 %s15, 1
      %s21 = ssub.s32 %s15, 2
      %s28 = sadd.s32 1, %s23
      %p29 = scmp.ge.s32.totalorder %s28, 2
      %s30 = scalar_select %p29, 0, %s28
      %s31 = sadd.s32 1, %s22
      %s32 = scalar_select %p29, %s31, %s22
      %p33 = scmp.ge.s32.totalorder %s32, 2
      %s34 = scalar_select %p33, 0, %s32
      %s35 = ssub.s32 %s22, %s34
      %s36 = ssub.s32 %s23, %s30
      %s37 = sor.u32 %s35, %s36
      %p38 = scmp.eq.s32.totalorder %s37, 0
      %s40 = sadd.s32 %s39, 1
      %s41 = scalar_select %p38, %s39, %s40
      %p44 = pneg %p38
      %p45 = scmp.eq.s32.totalorder %s15, 3
      %p46 = por %p44, %p45
      %p47 = scmp.ne.s32.totalorder %s39, %s42
      %p48 = scmp.eq.s32.totalorder %s15, 0
      %p49 = por %p47, %p48
      %p50 = scmp.ne.s32.totalorder %s39, %s42
      %p51 = scmp.eq.s32.totalorder %s20, 3
      %p52 = por %p50, %p51
      %p53 = scmp.ne.s32.totalorder %s42, %s43
      %p54 = scmp.eq.s32.totalorder %s20, 0
      %p55 = por %p53, %p54
      %p56 = scmp.ne.s32.totalorder %s42, %s43
      %p57 = scmp.eq.s32.totalorder %s21, 3
      %p58 = por %p56, %p57
      %p60 = scmp.ne.s32.totalorder %s43, %s59
      %p61 = scmp.eq.s32.totalorder %s21, 0
      %p62 = por %p60, %p61
      %s63 = sadd.s32 %s23, 1
      %s64 = sadd.s32 %s30, 1
      %s65 = ssub.s32 %s22, %s34
      %s66 = ssub.s32 %s63, %s64
      %s67 = sor.u32 %s65, %s66
      %p68 = scmp.eq.s32.totalorder %s67, 0
      %s70 = sadd.s32 %s69, 1
      %s71 = scalar_select %p68, %s69, %s70
      %p74 = pneg %p68
      %p75 = scmp.eq.s32.totalorder %s15, 3
      %p76 = por %p74, %p75
      %p77 = scmp.ne.s32.totalorder %s69, %s72
      %p78 = scmp.eq.s32.totalorder %s15, 0
      %p79 = por %p77, %p78
      %p80 = scmp.ne.s32.totalorder %s69, %s72
      %p81 = scmp.eq.s32.totalorder %s20, 3
      %p82 = por %p80, %p81
      %p83 = scmp.ne.s32.totalorder %s72, %s73
      %p84 = scmp.eq.s32.totalorder %s20, 0
      %p85 = por %p83, %p84
      %p86 = scmp.ne.s32.totalorder %s72, %s73
      %p87 = scmp.eq.s32.totalorder %s21, 3
      %p88 = por %p86, %p87
      %p90 = scmp.ne.s32.totalorder %s73, %s89
      %p91 = scmp.eq.s32.totalorder %s21, 0
      %p92 = por %p90, %p91
      %s93 = ssub.s32 %s23, %s30
      %p94 = scmp.eq.s32.totalorder %s93, 0
      %s96 = sadd.s32 %s95, 1
      %s97 = scalar_select %p94, %s95, %s96
      %p100 = pneg %p94
      %p101 = scmp.eq.s32.totalorder %s15, 3
      %p102 = por %p100, %p101
      %p103 = scmp.ne.s32.totalorder %s95, %s98
      %p104 = scmp.eq.s32.totalorder %s15, 0
      %p105 = por %p103, %p104
      %p106 = scmp.ne.s32.totalorder %s95, %s98
      %p107 = scmp.eq.s32.totalorder %s20, 3
      %p108 = por %p106, %p107
      %p109 = scmp.ne.s32.totalorder %s98, %s99
      %p110 = scmp.eq.s32.totalorder %s20, 0
      %p111 = por %p109, %p110
      %p112 = scmp.ne.s32.totalorder %s98, %s99
      %p113 = scmp.eq.s32.totalorder %s21, 3
      %p114 = por %p112, %p113
      %p116 = scmp.ne.s32.totalorder %s99, %s115
      %p117 = scmp.eq.s32.totalorder %s21, 0
      %p118 = por %p116, %p117
      %s120 = sadd.s32 %s119, 1
      %p123 = scmp.eq.s32.totalorder %s15, 3
      %p124 = scmp.ne.s32.totalorder %s119, %s121
      %p125 = scmp.eq.s32.totalorder %s15, 0
      %p126 = por %p124, %p125
      %p127 = scmp.ne.s32.totalorder %s119, %s121
      %p128 = scmp.eq.s32.totalorder %s20, 3
      %p129 = por %p127, %p128
      %p130 = scmp.ne.s32.totalorder %s121, %s122
      %p131 = scmp.eq.s32.totalorder %s20, 0
      %p132 = por %p130, %p131
      %p133 = scmp.ne.s32.totalorder %s121, %s122
      %p134 = scmp.eq.s32.totalorder %s21, 3
      %p135 = por %p133, %p134
      %p137 = scmp.ne.s32.totalorder %s122, %s136
      %p138 = scmp.eq.s32.totalorder %s21, 0
      %p139 = por %p137, %p138
      %s141 = sadd.s32 %s140, 1
      %p144 = scmp.eq.s32.totalorder %s15, 3
      %p145 = scmp.ne.s32.totalorder %s140, %s142
      %p146 = scmp.eq.s32.totalorder %s15, 0
      %p147 = por %p145, %p146
      %p148 = scmp.ne.s32.totalorder %s140, %s142
      %p149 = scmp.eq.s32.totalorder %s20, 3
      %p150 = por %p148, %p149
      %p151 = scmp.ne.s32.totalorder %s142, %s143
      %p152 = scmp.eq.s32.totalorder %s20, 0
      %p153 = por %p151, %p152
      %p154 = scmp.ne.s32.totalorder %s142, %s143
      %p155 = scmp.eq.s32.totalorder %s21, 3
      %p156 = por %p154, %p155
      %p158 = scmp.ne.s32.totalorder %s143, %s157
      %p159 = scmp.eq.s32.totalorder %s21, 0
      %p160 = por %p158, %p159
      %s162 = sadd.s32 %s161, 1
      %p165 = scmp.eq.s32.totalorder %s15, 3
      %p166 = scmp.ne.s32.totalorder %s161, %s163
      %p167 = scmp.eq.s32.totalorder %s15, 0
      %p168 = por %p166, %p167
      %p169 = scmp.ne.s32.totalorder %s161, %s163
      %p170 = scmp.eq.s32.totalorder %s20, 3
      %p171 = por %p169, %p170
      %p172 = scmp.ne.s32.totalorder %s163, %s164
      %p173 = scmp.eq.s32.totalorder %s20, 0
      %p174 = por %p172, %p173
      %p175 = scmp.ne.s32.totalorder %s163, %s164
      %p176 = scmp.eq.s32.totalorder %s21, 3
      %p177 = por %p175, %p176
      %p179 = scmp.ne.s32.totalorder %s164, %s178
      %p180 = scmp.eq.s32.totalorder %s21, 0
      %p181 = por %p179, %p180
      %s183 = sadd.s32 %s182, 1
      %p186 = scmp.eq.s32.totalorder %s15, 3
      %p187 = scmp.ne.s32.totalorder %s182, %s184
      %p188 = scmp.eq.s32.totalorder %s15, 0
      %p189 = por %p187, %p188
      %p190 = scmp.ne.s32.totalorder %s182, %s184
      %p191 = scmp.eq.s32.totalorder %s20, 3
      %p192 = por %p190, %p191
      %p193 = scmp.ne.s32.totalorder %s184, %s185
      %p194 = scmp.eq.s32.totalorder %s20, 0
      %p195 = por %p193, %p194
      %p196 = scmp.ne.s32.totalorder %s184, %s185
      %p197 = scmp.eq.s32.totalorder %s21, 3
      %p198 = por %p196, %p197
      %p200 = scmp.ne.s32.totalorder %s185, %s199
      %p201 = scmp.eq.s32.totalorder %s21, 0
      %p202 = por %p200, %p201
      %s203 = ssub.s32 %s22, %s34
      %s204 = ssub.s32 %s23, %s30
      %s205 = sor.u32 %s203, %s204
      %p206 = scmp.eq.s32.totalorder %s205, 0
      %s208 = sadd.s32 %s207, 1
      %s209 = scalar_select %p206, %s207, %s208
      %p212 = pneg %p206
      %p213 = scmp.eq.s32.totalorder %s15, 3
      %p214 = por %p212, %p213
      %p215 = scmp.ne.s32.totalorder %s207, %s210
      %p216 = scmp.eq.s32.totalorder %s15, 0
      %p217 = por %p215, %p216
      %p218 = scmp.ne.s32.totalorder %s207, %s210
      %p219 = scmp.eq.s32.totalorder %s20, 3
      %p220 = por %p218, %p219
      %p221 = scmp.ne.s32.totalorder %s210, %s211
      %p222 = scmp.eq.s32.totalorder %s20, 0
      %p223 = por %p221, %p222
      %p224 = scmp.ne.s32.totalorder %s210, %s211
      %p225 = scmp.eq.s32.totalorder %s21, 3
      %p226 = por %p224, %p225
      %p228 = scmp.ne.s32.totalorder %s211, %s227
      %p229 = scmp.eq.s32.totalorder %s21, 0
      %p230 = por %p228, %p229
      %s231 = ssub.s32 %s22, %s34
      %s232 = ssub.s32 %s23, %s30
      %s233 = sor.u32 %s231, %s232
      %p234 = scmp.eq.s32.totalorder %s233, 0
      %s236 = sadd.s32 %s235, 1
      %s237 = scalar_select %p234, %s235, %s236
      %p240 = pneg %p234
      %p241 = scmp.eq.s32.totalorder %s15, 3
      %p242 = por %p240, %p241
      %p243 = scmp.ne.s32.totalorder %s235, %s238
      %p244 = scmp.eq.s32.totalorder %s15, 0
      %p245 = por %p243, %p244
      %p246 = scmp.ne.s32.totalorder %s235, %s238
      %p247 = scmp.eq.s32.totalorder %s20, 3
      %p248 = por %p246, %p247
      %p249 = scmp.ne.s32.totalorder %s238, %s239
      %p250 = scmp.eq.s32.totalorder %s20, 0
      %p251 = por %p249, %p250
      %p252 = scmp.ne.s32.totalorder %s238, %s239
      %p253 = scmp.eq.s32.totalorder %s21, 3
      %p254 = por %p252, %p253
      %p256 = scmp.ne.s32.totalorder %s239, %s255
      %p257 = scmp.eq.s32.totalorder %s21, 0
      %p258 = por %p256, %p257
      %p259 = scmp.le.s32.totalorder 1, %s15
      %p260 = scmp.lt.s32.totalorder %s15, 5
      %p261 = pnand %p259, %p260
      %p262 = pneg %p261
      // Predicated region
      $region9: #{feature_extractor_forward.1} parent=5 // pred_check
        _
      $region10: #{feature_extractor_forward.1} parent=5 // pred_check_branch
        %264 = sbr.rel (%p261) target = $region12
      $region11: #{feature_extractor_forward.1} parent=5 // pred_region
        %s265 = ssub.s32 %s15, 1
        // Predicated region
        $region13: #{feature_extractor_forward.1} parent=11 // pred_check
          %p266 = pneg %p132
        $region14: #{feature_extractor_forward.1} parent=11 // pred_check_branch
          %268 = sbr.rel (%p266) target = $region16
        $region15: #{feature_extractor_forward.1} parent=11 // pred_region
          _
        $region16: #{feature_extractor_forward.1} parent=11 // pred_fallthru
          _
        // Predicated region
        $region17: #{feature_extractor_forward.1} parent=11 // pred_check
          %p269 = pneg %p153
        $region18: #{feature_extractor_forward.1} parent=11 // pred_check_branch
          %271 = sbr.rel (%p269) target = $region20
        $region19: #{feature_extractor_forward.1} parent=11 // pred_region
          _
        $region20: #{feature_extractor_forward.1} parent=11 // pred_fallthru
          _
        // Predicated region
        $region21: #{feature_extractor_forward.1} parent=11 // pred_check
          %p272 = pneg %p174
        $region22: #{feature_extractor_forward.1} parent=11 // pred_check_branch
          %274 = sbr.rel (%p272) target = $region24
        $region23: #{feature_extractor_forward.1} parent=11 // pred_region
          _
        $region24: #{feature_extractor_forward.1} parent=11 // pred_fallthru
          _
        // Predicated region
        $region25: #{feature_extractor_forward.1} parent=11 // pred_check
          %p275 = pneg %p195
        $region26: #{feature_extractor_forward.1} parent=11 // pred_check_branch
          %277 = sbr.rel (%p275) target = $region28
        $region27: #{feature_extractor_forward.1} parent=11 // pred_region
          _
        $region28: #{feature_extractor_forward.1} parent=11 // pred_fallthru
          _
      $region12: #{feature_extractor_forward.1} parent=5 // pred_fallthru
        _
      %p278 = scmp.lt.s32.totalorder %s15, 4
      // Predicated region
      $region29: #{feature_extractor_forward.1} parent=5 // pred_check
        %p279 = pneg %p278
      $region30: #{feature_extractor_forward.1} parent=5 // pred_check_branch
        %281 = sbr.rel (%p279) target = $region32
      $region31: #{feature_extractor_forward.1} parent=5 // pred_region
        // Predicated region
        $region33: #{feature_extractor_forward.1} parent=31 // pred_check
          %p282 = pneg %p49
        $region34: #{feature_extractor_forward.1} parent=31 // pred_check_branch
          %284 = sbr.rel (%p282) target = $region36
        $region35: #{feature_extractor_forward.1} parent=31 // pred_region
          %p285 = scmp.lt.s32.totalorder %s22, 1
          %s286 = scalar_select %p285, %s22, 1
          %p287 = scmp.lt.s32.totalorder %s23, 2
          %s288 = scalar_select %p287, %s23, 2
          %s289 = smul.addr %s286, 3
          %s290 = sadd.s32 %s288, %s289
          %s291 = smul.addr %s290, 2
          %s292 = scalar_lea.vmem %s0, %s291
        $region36: #{feature_extractor_forward.1} parent=31 // pred_fallthru
          _
        // Predicated region
        $region37: #{feature_extractor_forward.1} parent=31 // pred_check
          %p293 = pneg %p79
        $region38: #{feature_extractor_forward.1} parent=31 // pred_check_branch
          %295 = sbr.rel (%p293) target = $region40
        $region39: #{feature_extractor_forward.1} parent=31 // pred_region
          %s296 = sadd.s32 %s23, 1
          %p297 = scmp.lt.s32.totalorder %s22, 1
          %s298 = scalar_select %p297, %s22, 1
          %p299 = scmp.lt.s32.totalorder %s296, 2
          %s300 = scalar_select %p299, %s296, 2
          %s301 = smul.addr %s298, 3
          %s302 = sadd.s32 %s300, %s301
          %s303 = smul.addr %s302, 2
          %s304 = scalar_lea.vmem %s1, %s303
          %s305 = sadd.s32 %s23, 1
        $region40: #{feature_extractor_forward.1} parent=31 // pred_fallthru
          _
        // Predicated region
        $region41: #{feature_extractor_forward.1} parent=31 // pred_check
          %p306 = pneg %p105
        $region42: #{feature_extractor_forward.1} parent=31 // pred_check_branch
          %308 = sbr.rel (%p306) target = $region44
        $region43: #{feature_extractor_forward.1} parent=31 // pred_region
          %p309 = scmp.lt.s32.totalorder %s23, 1
          %s310 = scalar_select %p309, %s23, 1
          %s311 = scalar_lea.vmem %s2, %s310
        $region44: #{feature_extractor_forward.1} parent=31 // pred_fallthru
          _
      $region32: #{feature_extractor_forward.1} parent=5 // pred_fallthru
        _
      %p312 = scmp.le.s32.totalorder 1, %s15
      %p313 = scmp.lt.s32.totalorder %s15, 5
      %p314 = pnand %p312, %p313
      %p315 = pneg %p314
      // Predicated region
      $region45: #{feature_extractor_forward.1} parent=5 // pred_check
        _
      $region46: #{feature_extractor_forward.1} parent=5 // pred_check_branch
        %317 = sbr.rel (%p314) target = $region48
      $region47: #{feature_extractor_forward.1} parent=5 // pred_region
        %s318 = ssub.s32 %s15, 1
        %p319 = scmp.lt.s32.totalorder %s24, 1
        %s320 = scalar_select %p319, %s24, 1
        %p321 = scmp.lt.s32.totalorder %s25, 2
        %s322 = scalar_select %p321, %s25, 2
        %s323 = smul.addr %s320, 3
        %s324 = sadd.s32 %s322, %s323
        %s325 = smul.addr %s324, 2
        %s326 = scalar_lea.vmem %s0, %s325
        %p327 = pneg %p55
        %p328 = pneg %p52
        %s329 = sadd.s32 %s25, 1
        %p330 = scmp.lt.s32.totalorder %s24, 1
        %s331 = scalar_select %p330, %s24, 1
        %p332 = scmp.lt.s32.totalorder %s329, 2
        %s333 = scalar_select %p332, %s329, 2
        %s334 = smul.addr %s331, 3
        %s335 = sadd.s32 %s333, %s334
        %s336 = smul.addr %s335, 2
        %s337 = scalar_lea.vmem %s1, %s336
        %p338 = pneg %p85
        %p339 = pneg %p82
        %p340 = scmp.lt.s32.totalorder %s25, 1
        %s341 = scalar_select %p340, %s25, 1
        %s342 = scalar_lea.vmem %s2, %s341
        %p343 = pneg %p111
        %p344 = pneg %p108
        %p345 = pneg %p132
        %p346 = pneg %p129
        %p347 = pneg %p153
        %p348 = pneg %p150
        %p349 = pneg %p174
        %p350 = pneg %p171
        %p351 = pneg %p195
        %p352 = pneg %p192
        %p353 = pneg %p223
        %p354 = pneg %p220
        %s355 = sand.u32 %s210, 1
        %s356 = sand.u32 %s210, 1
        %s357 = smul.addr %s356, 32
        %s358 = scalar_lea.vmem [#allocation2], %s357
        %p359 = pneg %p251
        %p360 = pneg %p248
        %p361 = scmp.lt.s32.totalorder %s24, 1
        %s362 = scalar_select %p361, %s24, 1
        %p363 = scmp.lt.s32.totalorder %s25, 1
        %s364 = scalar_select %p363, %s25, 1
        %s365 = smul.addr %s362, 2
        %s366 = sadd.s32 %s364, %s365
        %s367 = scalar_lea.vmem %s8, %s366
        %p368 = scmp.lt.s32.totalorder %s24, 1
        %s369 = scalar_select %p368, %s24, 1
        %p370 = scmp.lt.s32.totalorder %s25, 2
        %s371 = scalar_select %p370, %s25, 2
        %s372 = smul.addr %s369, 3
        %s373 = sadd.s32 %s371, %s372
        %s374 = smul.addr %s373, 2
        %s375 = scalar_lea.vmem %s0, %s374
        %s376 = sadd.s32 %s25, 1
        %p377 = scmp.lt.s32.totalorder %s24, 1
        %s378 = scalar_select %p377, %s24, 1
        %p379 = scmp.lt.s32.totalorder %s376, 2
        %s380 = scalar_select %p379, %s376, 2
        %s381 = smul.addr %s378, 3
        %s382 = sadd.s32 %s380, %s381
        %s383 = smul.addr %s382, 2
        %s384 = scalar_lea.vmem %s1, %s383
        %s385 = sadd.s32 %s25, 1
        %p386 = scmp.lt.s32.totalorder %s25, 1
        %s387 = scalar_select %p386, %s25, 1
        %s388 = scalar_lea.vmem %s2, %s387
        %p389 = scmp.lt.s32.totalorder %s24, 1
        %s390 = scalar_select %p389, %s24, 1
        %p391 = scmp.lt.s32.totalorder %s25, 1
        %s392 = scalar_select %p391, %s25, 1
        %s393 = smul.addr %s390, 2
        %s394 = sadd.s32 %s392, %s393
        %s395 = scalar_lea.vmem %s8, %s394
        %v397 = vld [vmem:[%s375] sm:$0x3]
        %v398 = vld [vmem:[%s384] sm:$0x3]
        %v399 = vld [vmem:[%s388] sm:$0x1]
        %v401 = vpack.i.b16 %v399, %v399
        %v403 = vlaneseq
        %v404 = vshrl.u32 %v403, 7
        %v405 = vsub.s32 0, %v404
        %v406 = vrot.slane %v401, %v405
        %v407 = vmul.bf16 %v397, %v406
        %v408 = vshrl.u32 %v399, 16
        %v409 = vpack.i.b16 %v408, %v408
        %v411 = vlaneseq
        %v412 = vshrl.u32 %v411, 7
        %v413 = vsub.s32 0, %v412
        %v414 = vrot.slane %v409, %v413
        %416 = vrot.lane.b32.xlu0 %v414, 2
        %v417 = vpop.permute.xlu0 %416
        %v419 = vmul.bf16 %v397, %v417
        %v420 = vmul.bf16 %v398, %v417
        %422 = vrot.lane.b32.xlu0 %v406, 16
        %v423 = vpop.permute.xlu0 %422
        %v425 = vmul.bf16 %v397, %v423
        %v426 = vmul.bf16 %v398, %v423
        %427 = vrot.lane.b32.xlu0 %v414, 18
        %v428 = vpop.permute.xlu0 %427
        %v430 = vmul.bf16 %v397, %v428
        %v431 = vmul.bf16 %v398, %v428
        %432 = vrot.lane.b32.xlu0 %v406, 32
        %v433 = vpop.permute.xlu0 %432
        %v435 = vmul.bf16 %v397, %v433
        %v436 = vmul.bf16 %v398, %v433
        %437 = vrot.lane.b32.xlu0 %v414, 34
        %v438 = vpop.permute.xlu0 %437
        %v440 = vmul.bf16 %v397, %v438
        %v441 = vmul.bf16 %v398, %v438
        %v444 = vrot.slane %v397, 6
        %v445 = vrot.slane %v398, 6
        %446 = vrot.lane.b32.xlu0 %v444, 127
        %v447 = vpop.permute.xlu0 %446
        %448 = vrot.lane.b32.xlu0 %v445, 127
        %v449 = vpop.permute.xlu0 %448
        %vm450 = vcmask 1039360
        %v451 = vsel %vm450, %v447, %v449
        %v454 = vrot.slane %v419, 4
        %v455 = vrot.slane %v420, 4
        %456 = vrot.lane.b32.xlu0 %v454, 126
        %v457 = vpop.permute.xlu0 %456
        %458 = vrot.lane.b32.xlu0 %v455, 126
        %v459 = vpop.permute.xlu0 %458
        %vm460 = vcmask 1031168
        %v461 = vsel %vm460, %v457, %v459
        %v464 = vrot.slane %v425, 2
        %v465 = vrot.slane %v426, 2
        %466 = vrot.lane.b32.xlu0 %v464, 112
        %v467 = vpop.permute.xlu0 %466
        %468 = vrot.lane.b32.xlu0 %v465, 112
        %v469 = vpop.permute.xlu0 %468
        %vm470 = vcmask 916480
        %v471 = vsel %vm470, %v467, %v469
        %472 = vrot.lane.b32.xlu0 %v397, 111
        %v473 = vpop.permute.xlu0 %472
        %474 = vrot.lane.b32.xlu0 %v398, 111
        %v475 = vpop.permute.xlu0 %474
        %vm476 = vcmask 908288
        %v477 = vsel %vm476, %v473, %v475
        %v480 = vrot.slane %v430, 6
        %v481 = vrot.slane %v431, 6
        %482 = vrot.lane.b32.xlu0 %v480, 110
        %v483 = vpop.permute.xlu0 %482
        %484 = vrot.lane.b32.xlu0 %v481, 110
        %v485 = vpop.permute.xlu0 %484
        %vm486 = vcmask 900096
        %v487 = vsel %vm486, %v483, %v485
        %v490 = vrot.slane %v435, 4
        %v491 = vrot.slane %v436, 4
        %492 = vrot.lane.b32.xlu0 %v490, 96
        %v493 = vpop.permute.xlu0 %492
        %494 = vrot.lane.b32.xlu0 %v491, 96
        %v495 = vpop.permute.xlu0 %494
        %vm496 = vcmask 785408
        %v497 = vsel %vm496, %v493, %v495
        %v498 = vrot.slane %v397, 2
        %v499 = vrot.slane %v398, 2
        %500 = vrot.lane.b32.xlu0 %v498, 95
        %v501 = vpop.permute.xlu0 %500
        %502 = vrot.lane.b32.xlu0 %v499, 95
        %v503 = vpop.permute.xlu0 %502
        %vm504 = vcmask 777216
        %v505 = vsel %vm504, %v501, %v503
        %508 = vrot.lane.b32.xlu0 %v440, 94
        %v509 = vpop.permute.xlu0 %508
        %510 = vrot.lane.b32.xlu0 %v441, 94
        %v511 = vpop.permute.xlu0 %510
        %vm512 = vcmask 769024
        %v513 = vsel %vm512, %v509, %v511
        %vm514 = vcmask 1041408
        %v517 = vsel %vm514, %v407, %v451
        %vm518 = vcmask 1043456
        %v520 = vsel %vm518, %v517, %v461
        %vm521 = vcmask 1045504
        %v523 = vsel %vm521, %v520, %v471
        %v527 = vsel %vm514, %v477, %v487
        %v529 = vsel %vm518, %v527, %v497
        %v531 = vsel %vm521, %v529, %v505
        %v533 = vld [vmem:[%s3] sm:$0xf]
        %v534 = vld [vmem:[%s3 + $0x4] sm:$0xf]
        %v535 = vld [vmem:[%s3 + $0x8] sm:$0xf]
        %v536 = vld [vmem:[%s3 + $0xc] sm:$0xf]
        %v537 = vld [vmem:[%s4] sm:$0xff]
        %v538 = vld [vmem:[%s4 + $0x8] sm:$0xff]
        %v539 = vld [vmem:[%s4 + $0x10] sm:$0xff]
        %v540 = vld [vmem:[%s4 + $0x18] sm:$0xff]
        %542 = vset.pattern.permute.xlu0 0
        %543 = vperm.xlu0 %542, %v537
        %v544 = vpop.permute.xlu0 %543
        %547 = vset.pattern.permute.xlu0 0
        %548 = vperm.xlu0 %547, %v538
        %v549 = vpop.permute.xlu0 %548
        %552 = vset.pattern.permute.xlu0 0
        %553 = vperm.xlu0 %552, %v539
        %v554 = vpop.permute.xlu0 %553
        %557 = vset.pattern.permute.xlu0 0
        %558 = vperm.xlu0 %557, %v540
        %v559 = vpop.permute.xlu0 %558
        %v565 = vunpack.c.l.b16 %v533
        %v566 = vunpack.c.l.b16 %v534
        %v567 = vunpack.c.l.b16 %v535
        %v568 = vunpack.c.l.b16 %v536
        %v569 = vpack.c.b16 %v566, %v565
        %v570 = vpack.c.b16 %v568, %v567
        %vm571 = vcmask 293888
        %v573 = vsel %vm571, %v569, 0
        %v576 = vsel %vm571, %v570, 0
        %v579 = vsel %vm514, %v513, 0
        %581 = vmatprep.subr.bf16.mxu0 0
        %582 = vmatpush1.bf16.msra.mxu0 0
        %583 = vmatprep.subr.bf16.mxu0 0
        %584 = vmatpush1.bf16.msra.mxu0 0
        %585 = vmatprep.subr.bf16.mxu0 0
        %586 = vmatpush1.bf16.msra.mxu0 0
        %587 = vmatprep.subr.bf16.mxu0 0
        %588 = vmatpush1.bf16.msra.mxu0 0
        %589 = vmatprep.subr.bf16.mxu0 0
        %590 = vmatpush1.bf16.msra.mxu0 0
        %591 = vmatprep.subr.bf16.mxu0 0
        %592 = vmatpush1.bf16.msra.mxu0 %v579
        %593 = vmatprep.subr.bf16.mxu0 0
        %594 = vmatpush1.bf16.msra.mxu0 %v531
        %595 = vmatprep.subr.bf16.mxu0 0
        %596 = vmatpush1.bf16.msra.mxu0 %v523
        %597 = vmatprep.subr.bf16.mxu0 0
        %598 = vmatpush2.bf16.msra.mxu0 0
        %599 = vmatprep.subr.bf16.mxu0 0
        %600 = vmatpush2.bf16.msra.mxu0 0
        %601 = vmatprep.subr.bf16.mxu0 0
        %602 = vmatpush2.bf16.msra.mxu0 0
        %603 = vmatprep.subr.bf16.mxu0 0
        %604 = vmatpush2.bf16.msra.mxu0 0
        %605 = vmatprep.subr.bf16.mxu0 0
        %606 = vmatpush2.bf16.msra.mxu0 0
        %607 = vmatprep.subr.bf16.mxu0 0
        %608 = vmatpush2.bf16.msra.mxu0 0
        %609 = vmatprep.subr.bf16.mxu0 0
        %610 = vmatpush2.bf16.msra.mxu0 0
        %611 = vmatprep.subr.bf16.mxu0 0
        %612 = vmatpush2.bf16.msra.mxu0 0
        %613 = vmatprep.mubr.bf16.mxu0 0
        %614 = vmatmul.mubr.bf16.gmra.mxu0 %v573
        %v615 = vpop.f32.mrf.mxu0
        %v616 = vadd.f32 %v544, %v615
        %v617 = vpop.f32.mrf.mxu0
        %v618 = vpop.f32.mrf.mxu0
        %v619 = vadd.f32 %v549, %v618
        %v620 = vpop.f32.mrf.mxu0
        %621 = vmatprep.mubr.bf16.mxu0 0
        %622 = vmatmul.mubr.bf16.gmra.mxu0 %v576
        %v623 = vpop.f32.mrf.mxu0
        %v624 = vadd.f32 %v554, %v623
        %v625 = vpop.f32.mrf.mxu0
        %v626 = vpop.f32.mrf.mxu0
        %v627 = vadd.f32 %v559, %v626
        %v628 = vpop.f32.mrf.mxu0
        %629 = vdwg.mxu0
        %v630 = vmax.f32 %v616, 0.0
        %v631 = vmax.f32 %v619, 0.0
        %v632 = vmax.f32 %v624, 0.0
        %v633 = vmax.f32 %v627, 0.0
        %v634 = vld [vmem:[%s5] sm:$0xf]
        %v635 = vld [vmem:[%s5 + $0x4] sm:$0xf]
        %v636 = vld [vmem:[%s5 + $0x8] sm:$0xf]
        %v637 = vld [vmem:[%s5 + $0xc] sm:$0xf]
        %v638 = vld [vmem:[%s5 + $0x10] sm:$0xf]
        %v639 = vld [vmem:[%s5 + $0x14] sm:$0xf]
        %v640 = vld [vmem:[%s5 + $0x18] sm:$0xf]
        %v641 = vld [vmem:[%s5 + $0x1c] sm:$0xf]
        %v642 = vld [vmem:[%s5 + $0x20] sm:$0xf]
        %v643 = vpack.c.bf16 %v631, %v630
        %v644 = vpack.c.bf16 %v633, %v632
        %v645 = vld [vmem:[%s6] sm:$0xff]
        %v646 = vld [vmem:[%s6 + $0x8] sm:$0xff]
        %v647 = vld [vmem:[%s6 + $0x10] sm:$0xff]
        %v648 = vld [vmem:[%s6 + $0x18] sm:$0xff]
        %v649 = vld [vmem:[%s6 + $0x20] sm:$0xff]
        %v650 = vld [vmem:[%s6 + $0x28] sm:$0xff]
        %v651 = vld [vmem:[%s6 + $0x30] sm:$0xff]
        %v652 = vld [vmem:[%s6 + $0x38] sm:$0xff]
        %v653 = vld [vmem:[%s6 + $0x40] sm:$0xff]
        %655 = vset.pattern.permute.xlu0 0
        %656 = vperm.xlu0 %655, %v645
        %v657 = vpop.permute.xlu0 %656
        %660 = vset.pattern.permute.xlu0 0
        %661 = vperm.xlu0 %660, %v646
        %v662 = vpop.permute.xlu0 %661
        %665 = vset.pattern.permute.xlu0 0
        %666 = vperm.xlu0 %665, %v647
        %v667 = vpop.permute.xlu0 %666
        %670 = vset.pattern.permute.xlu0 0
        %671 = vperm.xlu0 %670, %v648
        %v672 = vpop.permute.xlu0 %671
        %675 = vset.pattern.permute.xlu0 0
        %676 = vperm.xlu0 %675, %v649
        %v677 = vpop.permute.xlu0 %676
        %680 = vset.pattern.permute.xlu0 0
        %681 = vperm.xlu0 %680, %v650
        %v682 = vpop.permute.xlu0 %681
        %685 = vset.pattern.permute.xlu0 0
        %686 = vperm.xlu0 %685, %v651
        %v687 = vpop.permute.xlu0 %686
        %690 = vset.pattern.permute.xlu0 0
        %691 = vperm.xlu0 %690, %v652
        %v692 = vpop.permute.xlu0 %691
        %695 = vset.pattern.permute.xlu0 0
        %696 = vperm.xlu0 %695, %v653
        %v697 = vpop.permute.xlu0 %696
        %v708 = vunpack.c.l.b16 %v634
        %v709 = vunpack.c.l.b16 %v635
        %v710 = vunpack.c.l.b16 %v636
        %v711 = vunpack.c.l.b16 %v637
        %v712 = vunpack.c.l.b16 %v638
        %v713 = vunpack.c.l.b16 %v639
        %v714 = vunpack.c.l.b16 %v640
        %v715 = vunpack.c.l.b16 %v641
        %v716 = vunpack.c.l.b16 %v642
        %v717 = vpack.c.b16 %v709, %v708
        %v718 = vpack.c.b16 %v711, %v710
        %v719 = vpack.c.b16 %v713, %v712
        %v720 = vpack.c.b16 %v715, %v714
        %v721 = vpack.c.b16 %v716, %v716
        %vm722 = vcmask 261120
        %v724 = vsel %vm722, %v717, 0
        %v727 = vsel %vm722, %v718, 0
        %v730 = vsel %vm722, %v719, 0
        %v733 = vsel %vm722, %v720, 0
        %v736 = vsel %vm722, %v721, 0
        %738 = vmatprep.subr.bf16.mxu0 0
        %739 = vmatpush1.bf16.msra.mxu0 0
        %740 = vmatprep.subr.bf16.mxu0 0
        %741 = vmatpush1.bf16.msra.mxu0 0
        %742 = vmatprep.subr.bf16.mxu0 0
        %743 = vmatpush1.bf16.msra.mxu0 0
        %744 = vmatprep.subr.bf16.mxu0 0
        %745 = vmatpush1.bf16.msra.mxu0 0
        %746 = vmatprep.subr.bf16.mxu0 0
        %747 = vmatpush1.bf16.msra.mxu0 0
        %748 = vmatprep.subr.bf16.mxu0 0
        %749 = vmatpush1.bf16.msra.mxu0 0
        %750 = vmatprep.subr.bf16.mxu0 0
        %751 = vmatpush1.bf16.msra.mxu0 %v644
        %752 = vmatprep.subr.bf16.mxu0 0
        %753 = vmatpush1.bf16.msra.mxu0 %v643
        %754 = vmatprep.subr.bf16.mxu0 0
        %755 = vmatpush2.bf16.msra.mxu0 0
        %756 = vmatprep.subr.bf16.mxu0 0
        %757 = vmatpush2.bf16.msra.mxu0 0
        %758 = vmatprep.subr.bf16.mxu0 0
        %759 = vmatpush2.bf16.msra.mxu0 0
        %760 = vmatprep.subr.bf16.mxu0 0
        %761 = vmatpush2.bf16.msra.mxu0 0
        %762 = vmatprep.subr.bf16.mxu0 0
        %763 = vmatpush2.bf16.msra.mxu0 0
        %764 = vmatprep.subr.bf16.mxu0 0
        %765 = vmatpush2.bf16.msra.mxu0 0
        %766 = vmatprep.subr.bf16.mxu0 0
        %767 = vmatpush2.bf16.msra.mxu0 0
        %768 = vmatprep.subr.bf16.mxu0 0
        %769 = vmatpush2.bf16.msra.mxu0 0
        %770 = vmatprep.mubr.bf16.mxu0 0
        %771 = vmatmul.mubr.bf16.gmra.mxu0 %v724
        %v772 = vpop.f32.mrf.mxu0
        %v773 = vadd.f32 %v657, %v772
        %v774 = vpop.f32.mrf.mxu0
        %v775 = vpop.f32.mrf.mxu0
        %v776 = vadd.f32 %v662, %v775
        %v777 = vpop.f32.mrf.mxu0
        %778 = vmatprep.mubr.bf16.mxu0 0
        %779 = vmatmul.mubr.bf16.gmra.mxu0 %v727
        %v780 = vpop.f32.mrf.mxu0
        %v781 = vadd.f32 %v667, %v780
        %v782 = vpop.f32.mrf.mxu0
        %v783 = vpop.f32.mrf.mxu0
        %v784 = vadd.f32 %v672, %v783
        %v785 = vpop.f32.mrf.mxu0
        %786 = vmatprep.mubr.bf16.mxu0 0
        %787 = vmatmul.mubr.bf16.gmra.mxu0 %v730
        %v788 = vpop.f32.mrf.mxu0
        %v789 = vadd.f32 %v677, %v788
        %v790 = vpop.f32.mrf.mxu0
        %v791 = vpop.f32.mrf.mxu0
        %v792 = vadd.f32 %v682, %v791
        %v793 = vpop.f32.mrf.mxu0
        %794 = vmatprep.mubr.bf16.mxu0 0
        %795 = vmatmul.mubr.bf16.gmra.mxu0 %v733
        %v796 = vpop.f32.mrf.mxu0
        %v797 = vadd.f32 %v687, %v796
        %v798 = vpop.f32.mrf.mxu0
        %v799 = vpop.f32.mrf.mxu0
        %v800 = vadd.f32 %v692, %v799
        %v801 = vpop.f32.mrf.mxu0
        %802 = vmatprep.mubr.bf16.mxu0 0
        %803 = vmatmul.mubr.bf16.gmra.mxu0 %v736
        %v804 = vpop.f32.mrf.mxu0
        %v805 = vadd.f32 %v697, %v804
        %v806 = vpop.f32.mrf.mxu0
        %v807 = vpop.f32.mrf.mxu0
        %v808 = vpop.f32.mrf.mxu0
        %809 = vdwg.mxu0
        %v810 = vmul.f32 %v773, %v773
        %v811 = vmul.f32 %v776, %v776
        %v812 = vmul.f32 %v781, %v781
        %v813 = vmul.f32 %v784, %v784
        %v814 = vmul.f32 %v789, %v789
        %v815 = vmul.f32 %v792, %v792
        %v816 = vmul.f32 %v797, %v797
        %v817 = vmul.f32 %v800, %v800
        %v818 = vadd.f32 %v810, %v811
        %v819 = vadd.f32 %v818, %v812
        %v820 = vadd.f32 %v819, %v813
        %v821 = vadd.f32 %v820, %v814
        %v822 = vadd.f32 %v821, %v815
        %v823 = vadd.f32 %v822, %v816
        %v824 = vadd.f32 %v823, %v817
        %v825 = vrot.slane %v824, 4
        %v826 = vadd.f32 %v824, %v825
        %v827 = vrot.slane %v826, 2
        %v828 = vadd.f32 %v826, %v827
        %v829 = vrot.slane %v828, 1
        %v830 = vadd.f32 %v828, %v829
        %v831 = vadd.f32 %v830, 1e-08
        %v832 = vrsqrt.pop %v831
        %v833 = vmul.f32 %v773, %v832
        %v834 = vmul.f32 %v776, %v832
        %v835 = vmul.f32 %v781, %v832
        %v836 = vmul.f32 %v784, %v832
        %v837 = vmul.f32 %v789, %v832
        %v838 = vmul.f32 %v792, %v832
        %v839 = vmul.f32 %v797, %v832
        %v840 = vmul.f32 %v800, %v832
        %v841 = vpack.c.bf16 %v834, %v833
        %v842 = vpack.c.bf16 %v836, %v835
        %v843 = vpack.c.bf16 %v838, %v837
        %v844 = vpack.c.bf16 %v840, %v839
        %v849 = vunpack.c.l.b16 %v841
        %v850 = vunpack.c.h.b16 %v841
        %v851 = vunpack.c.l.b16 %v842
        %v852 = vunpack.c.h.b16 %v842
        %v853 = vunpack.c.l.b16 %v843
        %v854 = vunpack.c.h.b16 %v843
        %v855 = vunpack.c.l.b16 %v844
        %v856 = vunpack.c.h.b16 %v844
        %v857 = vpack.c.b16 %v849, %v849
        %v858 = vpack.c.b16 %v850, %v850
        %v859 = vpack.c.b16 %v851, %v851
        %v860 = vpack.c.b16 %v852, %v852
        %v861 = vpack.c.b16 %v853, %v853
        %v862 = vpack.c.b16 %v854, %v854
        %v863 = vpack.c.b16 %v855, %v855
        %v864 = vpack.c.b16 %v856, %v856
        %873 = vst [vmem:[%s358] sm:$0xf] %v857
        %874 = vst [vmem:[%s358 + $0x4] sm:$0xf] %v858
        %875 = vst [vmem:[%s358 + $0x8] sm:$0xf] %v859
        %876 = vst [vmem:[%s358 + $0xc] sm:$0xf] %v860
        %877 = vst [vmem:[%s358 + $0x10] sm:$0xf] %v861
        %878 = vst [vmem:[%s358 + $0x14] sm:$0xf] %v862
        %879 = vst [vmem:[%s358 + $0x18] sm:$0xf] %v863
        %880 = vst [vmem:[%s358 + $0x1c] sm:$0xf] %v864
        %v881 = vxor.u32 %v805, 2147483648
        %v882 = vmul.f32 %v881, 1.442695
        %v883 = vpow.pop %v882
        %v884 = vadd.f32 %v883, 1.0
        %v885 = vrcp.pop %v884
        %v886 = vmul.f32 1.0, %v885
        %v887 = vpack.c.bf16 %v886, %v886
        %vm888 = vcmask 1040384
        %vm889 = vsmask.f32 256
        %vm890 = vmand %vm888, %vm889
        %v891 = vld [vmem:[%s395] sm:$0x1]
        %v892 = vsel %vm890, %v887, %v891
        %893 = vst [vmem:[%s395] sm:$0x1] %v892
        %s894 = sand.u32 %s210, 1
        %s895 = sand.u32 %s210, 1
        %s896 = smul.addr %s895, 32
        %s897 = scalar_lea.vmem [#allocation2], %s896
        %p898 = scmp.lt.s32.totalorder %s24, 1
        %s899 = scalar_select %p898, %s24, 1
        %p900 = scmp.lt.s32.totalorder %s25, 1
        %s901 = scalar_select %p900, %s25, 1
        %s902 = smul.addr %s899, 2
        %s903 = sadd.s32 %s901, %s902
        %s904 = scalar_lea.vmem %s8, %s903
        // Predicated region
        $region49: #{feature_extractor_forward.1} parent=47 // pred_check
          %p905 = pneg %p220
        $region50: #{feature_extractor_forward.1} parent=47 // pred_check_branch
          %907 = sbr.rel (%p905) target = $region52
        $region51: #{feature_extractor_forward.1} parent=47 // pred_region
          %s908 = smul.addr %s24, 16
          %s909 = sadd.s32 %s25, %s908
          %s910 = smul.addr %s909, 4
          %s911 = scalar_lea.vmem %s7, %s910
          // Predicated region
          $region53: #{feature_extractor_forward.1} parent=51 // pred_check
            _
          $region54: #{feature_extractor_forward.1} parent=51 // pred_check_branch
            %913 = sbr.rel (0) target = $region56
          $region55: #{feature_extractor_forward.1} parent=51 // pred_region
            // Predicated region
            $region57: #{feature_extractor_forward.1} parent=55 // pred_check
              _
            $region58: #{feature_extractor_forward.1} parent=55 // pred_check_branch
              %915 = sbr.rel target = $region60
            $region59: #{feature_extractor_forward.1} parent=55 // pred_region
              // Predicated region
              $region72: #{feature_extractor_forward.1} parent=59 // pred_check
                _
              $region73: #{feature_extractor_forward.1} parent=59 // pred_check_branch
                %945 = sbr.rel (0) target = $region75
              $region74: #{feature_extractor_forward.1} parent=59 // pred_region
                loop: start=0, step=1, limit=1
                $region76: #{feature_extractor_forward.1} parent=74 // loop_pre_header
                  _
                $region77: #{feature_extractor_forward.1} parent=74 // loop_header
                  %s947 = sphi 0, %s951
                  %p948 = scmp.ge.s32.totalorder %s947, 1
                  %s952 = sphi %s897, %s897
                  %s953 = sphi %s911, %s911
                $region78: #{feature_extractor_forward.1} parent=74 // loop_header_branch
                  %950 = sbr.rel (%p948) target = $region82
                $region79: #{feature_extractor_forward.1} parent=74 // loop_body
                  _
                $region80: #{feature_extractor_forward.1} parent=74 // loop_footer
                  %s951 = sadd.s32 1, %s947
                $region81: #{feature_extractor_forward.1} parent=74 // loop_footer_branch
                  %946 = sbr.rel target = $region77
                $region82: #{feature_extractor_forward.1} parent=74 // loop_exit
                  _
                %s955 = ssub.s32 16, 1
                loop: start=0, step=1, limit=1
                $region83: #{feature_extractor_forward.1} parent=74 // loop_pre_header
                  _
                $region84: #{feature_extractor_forward.1} parent=74 // loop_header
                  %s957 = sphi 0, %s961
                  %p958 = scmp.ge.s32.totalorder %s957, 1
                  %s962 = sphi %s897, %s897
                  %s963 = sphi %s911, %s911
                $region85: #{feature_extractor_forward.1} parent=74 // loop_header_branch
                  %960 = sbr.rel (%p958) target = $region89
                $region86: #{feature_extractor_forward.1} parent=74 // loop_body
                  %v964 = vld [vmem:[%s962] sm:%s955]
                  %965 = vst [vmem:[%s963] sm:%s955] %v964
                  %v966 = vld [vmem:[%s962 + $0x4] sm:%s955]
                  %967 = vst [vmem:[%s963 + $0x8] sm:%s955] %v966
                  %v968 = vld [vmem:[%s962 + $0x8] sm:%s955]
                  %969 = vst [vmem:[%s963 + $0x10] sm:%s955] %v968
                  %v970 = vld [vmem:[%s962 + $0xc] sm:%s955]
                  %971 = vst [vmem:[%s963 + $0x18] sm:%s955] %v970
                  %v972 = vld [vmem:[%s962 + $0x10] sm:%s955]
                  %973 = vst [vmem:[%s963 + $0x20] sm:%s955] %v972
                  %v974 = vld [vmem:[%s962 + $0x14] sm:%s955]
                  %975 = vst [vmem:[%s963 + $0x28] sm:%s955] %v974
                  %v976 = vld [vmem:[%s962 + $0x18] sm:%s955]
                  %977 = vst [vmem:[%s963 + $0x30] sm:%s955] %v976
                  %v978 = vld [vmem:[%s962 + $0x1c] sm:%s955]
                  %979 = vst [vmem:[%s963 + $0x38] sm:%s955] %v978
                $region87: #{feature_extractor_forward.1} parent=74 // loop_footer
                  %s961 = sadd.s32 1, %s957
                $region88: #{feature_extractor_forward.1} parent=74 // loop_footer_branch
                  %956 = sbr.rel target = $region84
                $region89: #{feature_extractor_forward.1} parent=74 // loop_exit
                  _
              $region75: #{feature_extractor_forward.1} parent=59 // pred_fallthru
                _
            $region60: #{feature_extractor_forward.1} parent=55 // pred_fallthru
              _
            // Predicated region
            $region61: #{feature_extractor_forward.1} parent=55 // pred_check
              _
            $region62: #{feature_extractor_forward.1} parent=55 // pred_check_branch
              %917 = sbr.rel (0) target = $region64
            $region63: #{feature_extractor_forward.1} parent=55 // pred_region
              %s919 = ssub.s32 16, 1
              loop: start=0, step=1, limit=1
              $region65: #{feature_extractor_forward.1} parent=63 // loop_pre_header
                _
              $region66: #{feature_extractor_forward.1} parent=63 // loop_header
                %s921 = sphi 0, %s925
                %p922 = scmp.ge.s32.totalorder %s921, 1
                %s926 = sphi %s897, %s897
                %s927 = sphi %s911, %s911
              $region67: #{feature_extractor_forward.1} parent=63 // loop_header_branch
                %924 = sbr.rel (%p922) target = $region71
              $region68: #{feature_extractor_forward.1} parent=63 // loop_body
                %v928 = vld [vmem:[%s926] sm:%s919]
                %929 = vst [vmem:[%s927] sm:%s919] %v928
                %v930 = vld [vmem:[%s926 + $0x4] sm:%s919]
                %931 = vst [vmem:[%s927 + $0x8] sm:%s919] %v930
                %v932 = vld [vmem:[%s926 + $0x8] sm:%s919]
                %933 = vst [vmem:[%s927 + $0x10] sm:%s919] %v932
                %v934 = vld [vmem:[%s926 + $0xc] sm:%s919]
                %935 = vst [vmem:[%s927 + $0x18] sm:%s919] %v934
                %v936 = vld [vmem:[%s926 + $0x10] sm:%s919]
                %937 = vst [vmem:[%s927 + $0x20] sm:%s919] %v936
                %v938 = vld [vmem:[%s926 + $0x14] sm:%s919]
                %939 = vst [vmem:[%s927 + $0x28] sm:%s919] %v938
                %v940 = vld [vmem:[%s926 + $0x18] sm:%s919]
                %941 = vst [vmem:[%s927 + $0x30] sm:%s919] %v940
                %v942 = vld [vmem:[%s926 + $0x1c] sm:%s919]
                %943 = vst [vmem:[%s927 + $0x38] sm:%s919] %v942
              $region69: #{feature_extractor_forward.1} parent=63 // loop_footer
                %s925 = sadd.s32 1, %s921
              $region70: #{feature_extractor_forward.1} parent=63 // loop_footer_branch
                %920 = sbr.rel target = $region66
              $region71: #{feature_extractor_forward.1} parent=63 // loop_exit
                _
            $region64: #{feature_extractor_forward.1} parent=55 // pred_fallthru
              _
          $region56: #{feature_extractor_forward.1} parent=51 // pred_fallthru
            _
          %980 = vnop
        $region52: #{feature_extractor_forward.1} parent=47 // pred_fallthru
          _
        // Predicated region
        $region90: #{feature_extractor_forward.1} parent=47 // pred_check
          %p981 = pneg %p248
        $region91: #{feature_extractor_forward.1} parent=47 // pred_check_branch
          %983 = sbr.rel (%p981) target = $region93
        $region92: #{feature_extractor_forward.1} parent=47 // pred_region
          _
        $region93: #{feature_extractor_forward.1} parent=47 // pred_fallthru
          _
      $region48: #{feature_extractor_forward.1} parent=5 // pred_fallthru
        _
      %p984 = scmp.le.s32.totalorder 2, %s15
      // Predicated region
      $region94: #{feature_extractor_forward.1} parent=5 // pred_check
        %p985 = pneg %p984
      $region95: #{feature_extractor_forward.1} parent=5 // pred_check_branch
        %987 = sbr.rel (%p985) target = $region97
      $region96: #{feature_extractor_forward.1} parent=5 // pred_region
        %s988 = ssub.s32 %s15, 2
        // Predicated region
        $region98: #{feature_extractor_forward.1} parent=96 // pred_check
          %p989 = pneg %p226
        $region99: #{feature_extractor_forward.1} parent=96 // pred_check_branch
          %991 = sbr.rel (%p989) target = $region101
        $region100: #{feature_extractor_forward.1} parent=96 // pred_region
          %s992 = sand.u32 %s211, 1
          %s993 = sand.u32 %s211, 1
          %s994 = smul.addr %s993, 32
          %s995 = scalar_lea.vmem [#allocation2], %s994
        $region101: #{feature_extractor_forward.1} parent=96 // pred_fallthru
          _
        // Predicated region
        $region102: #{feature_extractor_forward.1} parent=96 // pred_check
          %p996 = pneg %p254
        $region103: #{feature_extractor_forward.1} parent=96 // pred_check_branch
          %998 = sbr.rel (%p996) target = $region105
        $region104: #{feature_extractor_forward.1} parent=96 // pred_region
          %p999 = scmp.lt.s32.totalorder %s26, 1
          %s1000 = scalar_select %p999, %s26, 1
          %p1001 = scmp.lt.s32.totalorder %s27, 1
          %s1002 = scalar_select %p1001, %s27, 1
          %s1003 = smul.addr %s1000, 2
          %s1004 = sadd.s32 %s1002, %s1003
          %s1005 = scalar_lea.vmem %s8, %s1004
        $region105: #{feature_extractor_forward.1} parent=96 // pred_fallthru
          _
      $region97: #{feature_extractor_forward.1} parent=5 // pred_fallthru
        _
    $region6: #{feature_extractor_forward.1} parent=1 // loop_footer
      %s19 = sadd.s32 1, %s15
    $region7: #{feature_extractor_forward.1} parent=1 // loop_footer_branch
      %14 = sbr.rel target = $region3
    $region8: #{feature_extractor_forward.1} parent=1 // loop_exit
      _

</llo_original>
